<compile_context>
chip_gen: v5e
topology: v5e:2x2
jax: 0.10.0
libtpu: 0.0.40
codegen_flags: <defaults>
</compile_context>

<pallas_src>
import functools

import jax
import jax.numpy as jnp
from jax.experimental import pallas as pl
from jax.experimental.pallas import tpu as pltpu


# --------------------------------- kernel -----------------------------------

def _wbd_mp_kernel(x_ref, t_ref, d_ref, out_ref, *, inv_delta_sq):
    # x_ref / t_ref : (Bblk, C, Ht, W) native dtype (bf16 ok), cast to f32 here.
    # d_ref         : (B, 1, Ht, W)   view of x[:, C-1] over the FULL batch;
    #                 its batch axis pairs with the channel axis (B == C quirk).
    # out_ref       : (1, 1, 1, W)    f32 lane-dense partial sum for this step.
    x = x_ref[...].astype(jnp.float32)
    t = t_ref[...].astype(jnp.float32)
    d = d_ref[...][:, 0].astype(jnp.float32)          # (B, Ht, W) == (C, Ht, W)

    # Ponderation recomputed in-kernel: exp -> EUP, affine maps -> VPU, both
    # idle in this memory-bound kernel; removes all pond HBM traffic.
    e = jnp.exp(-(d * d) * inv_delta_sq)
    fn_pond = e * 0.9 + 0.1                           # (C, Ht, W)
    fp_pond = 1.0 - e * 0.5

    fn = x * (1.0 - t)                                # (Bblk, C, Ht, W)
    fp = (1.0 - x) * t
    # Right-aligned broadcast pairs the pond's leading axis with the channel axis.
    term = fn * fn_pond + fp * fp_pond                # (Bblk, C, Ht, W)

    # Leading-axis reduce = pure VPU adds; the sublane collapse goes to the
    # XLU (slack here) and shrinks the writeback from Ht*W to W floats.
    s = jnp.sum(term, axis=(0, 1))                    # (Ht, W)
    out_ref[...] = jnp.sum(s, axis=0, keepdims=True)[None, None]   # (1,1,1,W)


# ----------------------------- tiling helpers --------------------------------

def _divisors(n):
    return [d for d in range(1, n + 1) if n % d == 0]


def _sublane_align(dtype):
    # Packed sublane rows: 4-byte -> 8, 2-byte -> 16, 1-byte -> 32.
    return {4: 8, 2: 16, 1: 32}.get(jnp.dtype(dtype).itemsize, 8)


def _pick_h_tile(H, C, W, itemsize, target_bytes, prefer_align):
    if C * H * W * itemsize <= target_bytes:
        return H                                      # full H is always legal
    fitting = [d for d in _divisors(H) if C * d * W * itemsize <= target_bytes]
    for align in (prefer_align, 8):                   # packing pref, then (8,128) legality
        aligned = [d for d in fitting if d % align == 0]
        if aligned:
            return max(aligned)
    # No aligned divisor fits the budget: fall back to full H (always legal)
    # and let the batch-block picker shrink instead of emitting an unaligned Ht.
    return H


def _pick_b_tile(B, C, Ht, W, itemsize, target_bytes):
    cands = [d for d in _divisors(B) if d * C * Ht * W * itemsize <= target_bytes]
    return max(cands) if cands else 1


def _refine_for_parallelism(B, H, Bblk, Ht, prefer_align, min_steps=4):
    # v7x shards "parallel" grid axes across its 2 TensorCores; make sure even
    # tiny problems expose a few grid steps.  Shrink the batch block first so
    # the d/pond block stays resident across the (inner) batch sweep.
    def steps(bb, ht):
        return (B // bb) * (H // ht)
    while steps(Bblk, Ht) < min_steps:
        smaller_b = [d for d in _divisors(B) if d < Bblk]
        if smaller_b:
            Bblk = max(smaller_b)
            continue
        smaller_h = [d for d in _divisors(H)
                     if d < Ht and (d % prefer_align == 0 or d % 8 == 0)]
        if smaller_h:
            Ht = max(smaller_h)
            continue
        break
    return Bblk, Ht


def _vmem_budget():
    """Return (target_block_bytes, vmem_limit_bytes), generation-aware."""
    try:
        cap = int(pltpu.get_tpu_info().vmem_capacity_bytes)
    except Exception:
        cap = 64 * 1024 * 1024                        # assume the tightest (v7x)
    if cap >= 96 * 1024 * 1024:                       # v5e / v6e: 128 MiB VMEM
        return 4 * 1024 * 1024, 64 * 1024 * 1024
    # v7x: 64 MiB per TensorCore -- small blocks, headroom for double buffering
    # and the in-kernel f32 cast temporaries.
    return 2 * 1024 * 1024, min(48 * 1024 * 1024, (cap * 3) // 4)


# --------------------------------- wrapper -----------------------------------

def weighted_by_distance_mp(x, target, delta=0.1, *,
                            target_block_bytes=None, vmem_limit_bytes=None):
    assert x.ndim == 4, (
        "The input should be a 4D tensor, otherwise our implementation of "
        "ponderation by distance to MP might not give the wanted results.")
    B, C, H, W = x.shape
    assert target.shape == x.shape
    # The original broadcast of (B,H,W) against (B,C,H,W) requires B == C; the
    # degenerate B==1 / C==1 broadcasts are not supported here.
    assert B == C, "ponderation broadcast (B,H,W) vs (B,C,H,W) requires B == C"

    auto_block, auto_limit = _vmem_budget()
    if target_block_bytes is None:
        target_block_bytes = auto_block
    if vmem_limit_bytes is None:
        vmem_limit_bytes = auto_limit

    itemsize = jnp.dtype(x.dtype).itemsize
    prefer_align = _sublane_align(x.dtype)
    Ht = _pick_h_tile(H, C, W, itemsize, target_block_bytes, prefer_align)
    Bblk = _pick_b_tile(B, C, Ht, W, itemsize, target_block_bytes)
    Bblk, Ht = _refine_for_parallelism(B, H, Bblk, Ht, prefer_align)
    nb, nh = B // Bblk, H // Ht

    inv_delta_sq = 1.0 / float(delta * delta)         # multiply instead of divide
    kernel = functools.partial(_wbd_mp_kernel, inv_delta_sq=inv_delta_sq)
    last_c = C - 1

    partials = pl.pallas_call(
        kernel,
        out_shape=jax.ShapeDtypeStruct((nb, nh, 1, W), jnp.float32),
        # Batch-block is the innermost (fastest) grid axis so the d-view block,
        # which only depends on the H tile, stays resident across the sweep.
        grid=(nh, nb),
        in_specs=[
            pl.BlockSpec((Bblk, C, Ht, W), lambda j, i: (i, 0, j, 0)),
            pl.BlockSpec((Bblk, C, Ht, W), lambda j, i: (i, 0, j, 0)),
            # Second view of x: last channel, FULL batch, same H tile.
            pl.BlockSpec((B, 1, Ht, W), lambda j, i: (0, last_c, j, 0)),
        ],
        out_specs=pl.BlockSpec((1, 1, 1, W), lambda j, i: (i, j, 0, 0)),
        compiler_params=pltpu.CompilerParams(
            dimension_semantics=("parallel", "parallel"),
            vmem_limit_bytes=vmem_limit_bytes,
        ),
    )(x, target, x)

    return jnp.sum(partials) / jnp.float32(B * C * H * W)


def _reference(x, target, delta=0.1):
    # Pure-JAX reference of the same semantics (verification only).
    d = x[:, -1]
    e = jnp.exp(-(d / delta) ** 2)
    fn_pond = e * 0.9 + 0.1
    fp_pond = 1.0 - e * 0.5
    fn = x * (1.0 - target)
    fp = (1.0 - x) * target
    return jnp.mean(fn * fn_pond + fp * fp_pond)


if __name__ == "__main__":
    key = jax.random.PRNGKey(0)
    k1, k2 = jax.random.split(key)

    B, C, H, W = 4, 4, 16, 128                        # B == C so the broadcast is valid
    x = jax.random.uniform(k1, (B, C, H, W), dtype=jnp.float32)     # "probabilities"
    target = (jax.random.uniform(k2, (B, C, H, W)) > 0.5).astype(jnp.float32)

    out = jax.block_until_ready(weighted_by_distance_mp(x, target, delta=0.1))
    ref = _reference(x, target, delta=0.1)
    assert jnp.allclose(out, ref, atol=1e-5, rtol=1e-5), (out, ref)

    # bf16-in-HBM path: inputs stay bf16 in HBM, cast to f32 inside the kernel.
    x_bf = x.astype(jnp.bfloat16)
    t_bf = target.astype(jnp.bfloat16)
    out_bf = jax.block_until_ready(weighted_by_distance_mp(x_bf, t_bf, delta=0.1))
    ref_bf = _reference(x_bf.astype(jnp.float32), t_bf.astype(jnp.float32), delta=0.1)
    assert jnp.allclose(out_bf, ref_bf, atol=1e-5, rtol=1e-5), (out_bf, ref_bf)

    print("KERNEL_OK")
</pallas_src>

<mosaic_0001>
module attributes {stable_mosaic.version = 11 : i64} {
  func.func @_wbd_mp_kernel(%arg0: i32, %arg1: i32, %arg2: memref<1x4x16x128xf32, #tpu.memory_space<vmem>>, %arg3: memref<1x4x16x128xf32, #tpu.memory_space<vmem>>, %arg4: memref<4x1x16x128xf32, #tpu.memory_space<vmem>>, %arg5: memref<1x1x1x128xf32, #tpu.memory_space<vmem>>) attributes {dimension_semantics = [#tpu.dimension_semantics<parallel>, #tpu.dimension_semantics<parallel>], iteration_bounds = array<i64: 1, 4>, scalar_prefetch = 0 : i64, scratch_operands = 0 : i64, tpu.core_type = #tpu.core_type<tc>, window_params = [{transform_indices = @transform_0, window_bounds = array<i64: 1, 4, 16, 128>}, {transform_indices = @transform_1, window_bounds = array<i64: 1, 4, 16, 128>}, {transform_indices = @transform_2, window_bounds = array<i64: 4, 1, 16, 128>}, {transform_indices = @transform_3, window_bounds = array<i64: 1, 1, 1, 128>}]} {
    %c0 = arith.constant 0 : index
    %c0_0 = arith.constant 0 : index
    %c0_1 = arith.constant 0 : index
    %c0_2 = arith.constant 0 : index
    %0 = vector.load %arg2[%c0, %c0_0, %c0_1, %c0_2] : memref<1x4x16x128xf32, #tpu.memory_space<vmem>>, vector<1x4x16x128xf32>
    %c0_3 = arith.constant 0 : index
    %c0_4 = arith.constant 0 : index
    %c0_5 = arith.constant 0 : index
    %c0_6 = arith.constant 0 : index
    %1 = vector.load %arg3[%c0_3, %c0_4, %c0_5, %c0_6] : memref<1x4x16x128xf32, #tpu.memory_space<vmem>>, vector<1x4x16x128xf32>
    %c0_7 = arith.constant 0 : index
    %c0_8 = arith.constant 0 : index
    %c0_9 = arith.constant 0 : index
    %c0_10 = arith.constant 0 : index
    %2 = vector.load %arg4[%c0_7, %c0_8, %c0_9, %c0_10] : memref<4x1x16x128xf32, #tpu.memory_space<vmem>>, vector<4x1x16x128xf32>
    %3 = vector.shape_cast %2 : vector<4x1x16x128xf32> to vector<4x16x128xf32>
    %4 = arith.mulf %3, %3 : vector<4x16x128xf32>
    %cst = arith.constant 0.000000e+00 : f32
    %5 = vector.broadcast %cst : f32 to vector<4x16x128xf32>
    %6 = arith.subf %5, %4 : vector<4x16x128xf32>
    %cst_11 = arith.constant 1.000000e+02 : f32
    %7 = vector.broadcast %cst_11 : f32 to vector<4x16x128xf32>
    %8 = arith.mulf %6, %7 : vector<4x16x128xf32>
    %9 = math.exp %8 : vector<4x16x128xf32>
    %cst_12 = arith.constant 0.899999976 : f32
    %10 = vector.broadcast %cst_12 : f32 to vector<4x16x128xf32>
    %11 = arith.mulf %9, %10 : vector<4x16x128xf32>
    %cst_13 = arith.constant 1.000000e-01 : f32
    %12 = vector.broadcast %cst_13 : f32 to vector<4x16x128xf32>
    %13 = arith.addf %11, %12 : vector<4x16x128xf32>
    %cst_14 = arith.constant 5.000000e-01 : f32
    %14 = vector.broadcast %cst_14 : f32 to vector<4x16x128xf32>
    %15 = arith.mulf %9, %14 : vector<4x16x128xf32>
    %cst_15 = arith.constant 1.000000e+00 : f32
    %16 = vector.broadcast %cst_15 : f32 to vector<4x16x128xf32>
    %17 = arith.subf %16, %15 : vector<4x16x128xf32>
    %cst_16 = arith.constant 1.000000e+00 : f32
    %18 = vector.broadcast %cst_16 : f32 to vector<1x4x16x128xf32>
    %19 = arith.subf %18, %1 : vector<1x4x16x128xf32>
    %20 = arith.mulf %0, %19 : vector<1x4x16x128xf32>
    %cst_17 = arith.constant 1.000000e+00 : f32
    %21 = vector.broadcast %cst_17 : f32 to vector<1x4x16x128xf32>
    %22 = arith.subf %21, %0 : vector<1x4x16x128xf32>
    %23 = arith.mulf %22, %1 : vector<1x4x16x128xf32>
    %24 = vector.shape_cast %13 : vector<4x16x128xf32> to vector<1x4x16x128xf32>
    %25 = arith.mulf %20, %24 : vector<1x4x16x128xf32>
    %26 = vector.shape_cast %17 : vector<4x16x128xf32> to vector<1x4x16x128xf32>
    %27 = arith.mulf %23, %26 : vector<1x4x16x128xf32>
    %28 = arith.addf %25, %27 : vector<1x4x16x128xf32>
    %cst_18 = arith.constant dense<0.000000e+00> : vector<16x128xf32>
    %29 = vector.multi_reduction <add>, %28, %cst_18 [0, 1] : vector<1x4x16x128xf32> to vector<16x128xf32>
    %cst_19 = arith.constant dense<0.000000e+00> : vector<128xf32>
    %30 = vector.multi_reduction <add>, %29, %cst_19 [0] : vector<16x128xf32> to vector<128xf32>
    %31 = vector.shape_cast %30 : vector<128xf32> to vector<1x128xf32>
    %32 = vector.shape_cast %31 : vector<1x128xf32> to vector<1x1x1x128xf32>
    %c0_20 = arith.constant 0 : index
    %c0_21 = arith.constant 0 : index
    %c0_22 = arith.constant 0 : index
    %c0_23 = arith.constant 0 : index
    %33 = vector.load %arg5[%c0_20, %c0_21, %c0_22, %c0_23] : memref<1x1x1x128xf32, #tpu.memory_space<vmem>>, vector<1x1x1x128xf32>
    tpu.vector_store %arg5[%c0_20, %c0_21, %c0_22, %c0_23], %32 {strides = array<i32>} : memref<1x1x1x128xf32, #tpu.memory_space<vmem>>, vector<1x1x1x128xf32>,
    return
  }
  func.func @transform_0(%arg0: i32, %arg1: i32) -> (i32, i32, i32, i32) {
    %c0_i32 = arith.constant 0 : i32
    %c0_i32_0 = arith.constant 0 : i32
    %c0_i32_1 = arith.constant 0 : i32
    return %arg1, %c0_i32, %arg0, %c0_i32_0 : i32, i32, i32, i32
  }
  func.func @transform_1(%arg0: i32, %arg1: i32) -> (i32, i32, i32, i32) {
    %c0_i32 = arith.constant 0 : i32
    %c0_i32_0 = arith.constant 0 : i32
    %c0_i32_1 = arith.constant 0 : i32
    return %arg1, %c0_i32, %arg0, %c0_i32_0 : i32, i32, i32, i32
  }
  func.func @transform_2(%arg0: i32, %arg1: i32) -> (i32, i32, i32, i32) {
    %c0_i32 = arith.constant 0 : i32
    %c3_i32 = arith.constant 3 : i32
    %c0_i32_0 = arith.constant 0 : i32
    %c0_i32_1 = arith.constant 0 : i32
    return %c0_i32, %c3_i32, %arg0, %c0_i32_0 : i32, i32, i32, i32
  }
  func.func @transform_3(%arg0: i32, %arg1: i32) -> (i32, i32, i32, i32) {
    %c0_i32 = arith.constant 0 : i32
    %c0_i32_0 = arith.constant 0 : i32
    %c0_i32_1 = arith.constant 0 : i32
    return %arg1, %arg0, %c0_i32, %c0_i32_0 : i32, i32, i32, i32
  }
}

</mosaic_0001>

<llo_original>
// kernel: tpu_custom_call.1
$region0: #{tpu_custom_call.1}
  #allocation0 [shape = 'u32[]', space=smem, size = 0x4, offset = 0x4, fixed_abs, tag = 'smem constant byte address 0x4 - core index']
  #allocation1 [shape = 'u32[72,128]{1,0:T(1,128)}', space=vmem, size = 0x9000, scoped, tag = 'internal scratch']
  #allocation9 [shape = 's32[]', space=sflag, size = 0x4, offset = 0, fixed_abs, tag = 'sflag constant byte address 0x0 - dummy sync flag']
  %s0 = inlined_call_operand.hbm [shape: f32[4,4,16,128], index: 0, kind: input, shape index: {}]
  %s1 = inlined_call_operand.hbm [shape: f32[4,4,16,128], index: 1, kind: input, shape index: {}]
  %s2 = inlined_call_operand.hbm [shape: f32[4,4,16,128], index: 2, kind: input, shape index: {}]
  %s3 = inlined_call_operand.hbm [shape: f32[4,1,1,128], index: 3, kind: output, shape index: {}]
  %s4 = sld [smem:[#allocation0]]
  $region57: #{tpu_custom_call.1} parent=0
    _
  %s6 = ssub.s32 1, %s4
  %s7 = scalar_select 0, %s6, %s4
  $region1: #{tpu_custom_call.1} parent=0
    #allocation2 [shape = 'u8[65536]{0}', space=vmem, size = 0x10000, scoped, tag = 'input window, operand 0']
    #allocation3 [shape = 's32[2]{0}', space=sflag, size = 0x8, scoped, tag = 'scoped memory for tpu_custom_call.1']
    #allocation4 [shape = 's32[2]{0}', space=sflag, size = 0x8, scoped, tag = 'scoped memory for tpu_custom_call.1']
    #allocation5 [shape = 'u8[65536]{0}', space=vmem, size = 0x10000, scoped, tag = 'input window, operand 1']
    #allocation6 [shape = 's32[2]{0}', space=sflag, size = 0x8, scoped, tag = 'scoped memory for tpu_custom_call.1']
    #allocation7 [shape = 'u8[32768]{0}', space=vmem, size = 0x8000, scoped, tag = 'input window, operand 2, single buffered']
    #allocation8 [shape = 'u8[1024]{0}', space=vmem, size = 0x400, scoped, tag = 'output window, operand 0']
    %8 = vsyncpa [#allocation3], 0
    %s9 = scalar_lea.sflag [#allocation3], 1
    %10 = vsyncpa %s9, 0
    %11 = vsyncpa [#allocation6], 0
    %s12 = scalar_lea.sflag [#allocation6], 1
    %13 = vsyncpa %s12, 0
    %14 = vsyncpa [#allocation4], 0
    %s15 = scalar_lea.sflag [#allocation4], 1
    %16 = vsyncpa %s15, 0
    loop: start=0, step=1, limit=6
    $region2: #{tpu_custom_call.1} parent=1 // loop_pre_header
      _
    $region3: #{tpu_custom_call.1} parent=1 // loop_header
      %s18 = sphi 0, %s22
      %p19 = scmp.ge.s32.totalorder %s18, 6
      %s25 = sphi 0, %s37
      %s26 = sphi 0, %s33
      %s27 = sphi 0, %s25
      %s28 = sphi 0, %s26
      %s29 = sphi 0, %s27
      %s30 = sphi 0, %s28
      %s42 = sphi 0, %s44
      %s45 = sphi 0, %s42
      %s46 = sphi 0, %s45
      %s62 = sphi 0, %s46
      %s70 = sphi 0, %s72
      %s73 = sphi 0, %s70
      %s74 = sphi 0, %s73
      %s90 = sphi 0, %s74
      %s96 = sphi 0, %s98
      %s99 = sphi 0, %s96
      %s100 = sphi 0, %s99
      %s116 = sphi 0, %s100
      %s124 = sphi 0, %s126
      %s127 = sphi 0, %s124
      %s128 = sphi 0, %s127
      %s144 = sphi 0, %s128
    $region4: #{tpu_custom_call.1} parent=1 // loop_header_branch
      %21 = sbr.rel (%p19) target = $region8
    $region5: #{tpu_custom_call.1} parent=1 // loop_body
      %s23 = ssub.s32 %s18, 1
      %s24 = ssub.s32 %s18, 2
      %s31 = sadd.s32 1, %s26
      %p32 = scmp.ge.s32.totalorder %s31, 4
      %s33 = scalar_select %p32, 0, %s31
      %s34 = sadd.s32 1, %s25
      %s35 = scalar_select %p32, %s34, %s25
      %p36 = scmp.ge.s32.totalorder %s35, 1
      %s37 = scalar_select %p36, 0, %s35
      %s38 = ssub.s32 %s26, %s33
      %s39 = ssub.s32 %s25, %s37
      %s40 = sor.u32 %s38, %s39
      %p41 = scmp.eq.s32.totalorder %s40, 0
      %s43 = sadd.s32 %s42, 1
      %s44 = scalar_select %p41, %s42, %s43
      %p47 = pneg %p41
      %p48 = scmp.eq.s32.totalorder %s18, 3
      %p49 = por %p47, %p48
      %p50 = scmp.ne.s32.totalorder %s42, %s45
      %p51 = scmp.eq.s32.totalorder %s18, 0
      %p52 = por %p50, %p51
      %p53 = scmp.ne.s32.totalorder %s42, %s45
      %p54 = scmp.eq.s32.totalorder %s23, 3
      %p55 = por %p53, %p54
      %p56 = scmp.ne.s32.totalorder %s45, %s46
      %p57 = scmp.eq.s32.totalorder %s23, 0
      %p58 = por %p56, %p57
      %p59 = scmp.ne.s32.totalorder %s45, %s46
      %p60 = scmp.eq.s32.totalorder %s24, 3
      %p61 = por %p59, %p60
      %p63 = scmp.ne.s32.totalorder %s46, %s62
      %p64 = scmp.eq.s32.totalorder %s24, 0
      %p65 = por %p63, %p64
      %s66 = ssub.s32 %s26, %s33
      %s67 = ssub.s32 %s25, %s37
      %s68 = sor.u32 %s66, %s67
      %p69 = scmp.eq.s32.totalorder %s68, 0
      %s71 = sadd.s32 %s70, 1
      %s72 = scalar_select %p69, %s70, %s71
      %p75 = pneg %p69
      %p76 = scmp.eq.s32.totalorder %s18, 3
      %p77 = por %p75, %p76
      %p78 = scmp.ne.s32.totalorder %s70, %s73
      %p79 = scmp.eq.s32.totalorder %s18, 0
      %p80 = por %p78, %p79
      %p81 = scmp.ne.s32.totalorder %s70, %s73
      %p82 = scmp.eq.s32.totalorder %s23, 3
      %p83 = por %p81, %p82
      %p84 = scmp.ne.s32.totalorder %s73, %s74
      %p85 = scmp.eq.s32.totalorder %s23, 0
      %p86 = por %p84, %p85
      %p87 = scmp.ne.s32.totalorder %s73, %s74
      %p88 = scmp.eq.s32.totalorder %s24, 3
      %p89 = por %p87, %p88
      %p91 = scmp.ne.s32.totalorder %s74, %s90
      %p92 = scmp.eq.s32.totalorder %s24, 0
      %p93 = por %p91, %p92
      %s94 = ssub.s32 %s25, %s37
      %p95 = scmp.eq.s32.totalorder %s94, 0
      %s97 = sadd.s32 %s96, 1
      %s98 = scalar_select %p95, %s96, %s97
      %p101 = pneg %p95
      %p102 = scmp.eq.s32.totalorder %s18, 3
      %p103 = por %p101, %p102
      %p104 = scmp.ne.s32.totalorder %s96, %s99
      %p105 = scmp.eq.s32.totalorder %s18, 0
      %p106 = por %p104, %p105
      %p107 = scmp.ne.s32.totalorder %s96, %s99
      %p108 = scmp.eq.s32.totalorder %s23, 3
      %p109 = por %p107, %p108
      %p110 = scmp.ne.s32.totalorder %s99, %s100
      %p111 = scmp.eq.s32.totalorder %s23, 0
      %p112 = por %p110, %p111
      %p113 = scmp.ne.s32.totalorder %s99, %s100
      %p114 = scmp.eq.s32.totalorder %s24, 3
      %p115 = por %p113, %p114
      %p117 = scmp.ne.s32.totalorder %s100, %s116
      %p118 = scmp.eq.s32.totalorder %s24, 0
      %p119 = por %p117, %p118
      %s120 = ssub.s32 %s26, %s33
      %s121 = ssub.s32 %s25, %s37
      %s122 = sor.u32 %s120, %s121
      %p123 = scmp.eq.s32.totalorder %s122, 0
      %s125 = sadd.s32 %s124, 1
      %s126 = scalar_select %p123, %s124, %s125
      %p129 = pneg %p123
      %p130 = scmp.eq.s32.totalorder %s18, 3
      %p131 = por %p129, %p130
      %p132 = scmp.ne.s32.totalorder %s124, %s127
      %p133 = scmp.eq.s32.totalorder %s18, 0
      %p134 = por %p132, %p133
      %p135 = scmp.ne.s32.totalorder %s124, %s127
      %p136 = scmp.eq.s32.totalorder %s23, 3
      %p137 = por %p135, %p136
      %p138 = scmp.ne.s32.totalorder %s127, %s128
      %p139 = scmp.eq.s32.totalorder %s23, 0
      %p140 = por %p138, %p139
      %p141 = scmp.ne.s32.totalorder %s127, %s128
      %p142 = scmp.eq.s32.totalorder %s24, 3
      %p143 = por %p141, %p142
      %p145 = scmp.ne.s32.totalorder %s128, %s144
      %p146 = scmp.eq.s32.totalorder %s24, 0
      %p147 = por %p145, %p146
      %p148 = scmp.le.s32.totalorder 1, %s18
      %p149 = scmp.lt.s32.totalorder %s18, 5
      %p150 = pnand %p148, %p149
      %p151 = pneg %p150
      // Predicated region
      $region9: #{tpu_custom_call.1} parent=5 // pred_check
        _
      $region10: #{tpu_custom_call.1} parent=5 // pred_check_branch
        %153 = sbr.rel (%p150) target = $region12
      $region11: #{tpu_custom_call.1} parent=5 // pred_region
        %s154 = ssub.s32 %s18, 1
        // Predicated region
        $region13: #{tpu_custom_call.1} parent=11 // pred_check
          %p155 = pneg %p112
        $region14: #{tpu_custom_call.1} parent=11 // pred_check_branch
          %157 = sbr.rel (%p155) target = $region16
        $region15: #{tpu_custom_call.1} parent=11 // pred_region
          #allocation10 [shape = 'u32[6]{0}', space=smem, size = 0x18, scoped, tag = 'DMA stride descriptor']
          %s158 = smul.u32 2, %s27
          %160 = vsyncadd [#allocation6], 0
          %s161 = sadd.s32 %s158, 6
          %s162 = smul.addr %s161, 8
          %s163 = scalar_lea.hbm %s2, %s162
          %s165 = sshll.u32 1, 14
          %s166 = sxor.u32 4294967295, %s165
          %s168 = sld [smem:[#allocation0]]
          %s169 = sadd.s32 2, %s168
          %s171 = sshll.u32 7, 26
          %s172 = sxor.u32 4294967295, %s171
          %s173 = sand.u32 0, %s172
          %s174 = sshll.u32 %s169, 26
          %s175 = sor.u32 %s173, %s174
          %s176 = sshll.u32 %s163, 4
          %s177 = int_to_ptr.hbm [resolvable:$true] %s176
          %s178 = sshll.u32 [#allocation7], 4
          %s179 = int_to_ptr.vmem [resolvable:$true] %s178
          %185 = sst [smem:[#allocation10]] 1024
          %s186 = scalar_lea.smem [#allocation10], 1
          %187 = sst [smem:[%s186]] 256
          %s188 = scalar_lea.smem [#allocation10], 2
          %189 = sst [smem:[%s188]] 2
          %s190 = scalar_lea.smem [#allocation10], 3
          %191 = sst [smem:[%s190]] 128
          %s192 = scalar_lea.smem [#allocation10], 4
          %193 = sst [smem:[%s192]] 128
          %s194 = scalar_lea.smem [#allocation10], 5
          %195 = sst [smem:[%s194]] 8
          %197 = dma.general %s177, 1024, %s179, [#allocation6], [#allocation9], [#allocation10], %s175, 0
        $region16: #{tpu_custom_call.1} parent=11 // pred_fallthru
          _
      $region12: #{tpu_custom_call.1} parent=5 // pred_fallthru
        _
      %p198 = scmp.lt.s32.totalorder %s18, 4
      // Predicated region
      $region17: #{tpu_custom_call.1} parent=5 // pred_check
        %p199 = pneg %p198
      $region18: #{tpu_custom_call.1} parent=5 // pred_check_branch
        %201 = sbr.rel (%p199) target = $region20
      $region19: #{tpu_custom_call.1} parent=5 // pred_region
        // Predicated region
        $region21: #{tpu_custom_call.1} parent=19 // pred_check
          %p202 = pneg %p52
        $region22: #{tpu_custom_call.1} parent=19 // pred_check_branch
          %204 = sbr.rel (%p202) target = $region24
        $region23: #{tpu_custom_call.1} parent=19 // pred_region
          %s205 = sand.u32 %s42, 1
          %s206 = scalar_lea.sflag [#allocation3], %s205
          %s207 = sand.u32 %s42, 1
          %s208 = smul.addr %s207, 64
          %s209 = scalar_lea.vmem [#allocation2], %s208
          %s210 = smul.u32 2, %s25
          %212 = vsyncadd %s206, 0
          %s213 = smul.addr %s26, 8
          %s214 = sadd.s32 %s210, %s213
          %s215 = smul.addr %s214, 8
          %s216 = scalar_lea.hbm %s0, %s215
          %s217 = sshll.u32 %s216, 4
          %s218 = int_to_ptr.hbm [resolvable:$true] %s217
          %s219 = sshll.u32 %s209, 4
          %s220 = int_to_ptr.vmem [resolvable:$true] %s219
          %225 = dma.hbm_to_vmem [thread:$0]  %s218, 1024, %s220, %s206, 128, 128, 8
        $region24: #{tpu_custom_call.1} parent=19 // pred_fallthru
          _
        // Predicated region
        $region25: #{tpu_custom_call.1} parent=19 // pred_check
          %p226 = pneg %p80
        $region26: #{tpu_custom_call.1} parent=19 // pred_check_branch
          %228 = sbr.rel (%p226) target = $region28
        $region27: #{tpu_custom_call.1} parent=19 // pred_region
          %s229 = sand.u32 %s18, 1
          %s230 = scalar_lea.sflag [#allocation6], %s229
          %s231 = sand.u32 %s70, 1
          %s232 = smul.addr %s231, 64
          %s233 = scalar_lea.vmem [#allocation5], %s232
          %s234 = smul.u32 2, %s25
          %236 = vsyncadd %s230, 0
          %s237 = smul.addr %s26, 8
          %s238 = sadd.s32 %s234, %s237
          %s239 = smul.addr %s238, 8
          %s240 = scalar_lea.hbm %s1, %s239
          %s241 = sshll.u32 %s240, 4
          %s242 = int_to_ptr.hbm [resolvable:$true] %s241
          %s243 = sshll.u32 %s233, 4
          %s244 = int_to_ptr.vmem [resolvable:$true] %s243
          %249 = dma.hbm_to_vmem [thread:$0]  %s242, 1024, %s244, %s230, 128, 128, 8
        $region28: #{tpu_custom_call.1} parent=19 // pred_fallthru
          _
      $region20: #{tpu_custom_call.1} parent=5 // pred_fallthru
        _
      %p250 = scmp.le.s32.totalorder 1, %s18
      %p251 = scmp.lt.s32.totalorder %s18, 5
      %p252 = pnand %p250, %p251
      %p253 = pneg %p252
      // Predicated region
      $region29: #{tpu_custom_call.1} parent=5 // pred_check
        _
      $region30: #{tpu_custom_call.1} parent=5 // pred_check_branch
        %255 = sbr.rel (%p252) target = $region32
      $region31: #{tpu_custom_call.1} parent=5 // pred_region
        %s256 = ssub.s32 %s18, 1
        %s257 = sand.u32 %s45, 1
        %s258 = scalar_lea.sflag [#allocation3], %s257
        %s259 = sand.u32 %s45, 1
        %s260 = smul.addr %s259, 64
        %s261 = scalar_lea.vmem [#allocation2], %s260
        // Predicated region
        $region33: #{tpu_custom_call.1} parent=31 // pred_check
          %p262 = pneg %p58
        $region34: #{tpu_custom_call.1} parent=31 // pred_check_branch
          %264 = sbr.rel (%p262) target = $region36
        $region35: #{tpu_custom_call.1} parent=31 // pred_region
          %266 = dma.done %s258, 1024
        $region36: #{tpu_custom_call.1} parent=31 // pred_fallthru
          _
        %s267 = sand.u32 %s23, 1
        %s268 = scalar_lea.sflag [#allocation6], %s267
        %s269 = sand.u32 %s73, 1
        %s270 = smul.addr %s269, 64
        %s271 = scalar_lea.vmem [#allocation5], %s270
        // Predicated region
        $region37: #{tpu_custom_call.1} parent=31 // pred_check
          %p272 = pneg %p86
        $region38: #{tpu_custom_call.1} parent=31 // pred_check_branch
          %274 = sbr.rel (%p272) target = $region40
        $region39: #{tpu_custom_call.1} parent=31 // pred_region
          %276 = dma.done %s268, 1024
        $region40: #{tpu_custom_call.1} parent=31 // pred_fallthru
          _
        // Predicated region
        $region41: #{tpu_custom_call.1} parent=31 // pred_check
          %p277 = pneg %p112
        $region42: #{tpu_custom_call.1} parent=31 // pred_check_branch
          %279 = sbr.rel (%p277) target = $region44
        $region43: #{tpu_custom_call.1} parent=31 // pred_region
          %281 = dma.done [#allocation6], 1024
        $region44: #{tpu_custom_call.1} parent=31 // pred_fallthru
          _
        %s282 = sand.u32 %s45, 1
        %s283 = scalar_lea.sflag [#allocation3], %s282
        %s284 = sand.u32 %s45, 1
        %s285 = smul.addr %s284, 64
        %s286 = scalar_lea.vmem [#allocation2], %s285
        %p287 = pneg %p58
        %p288 = pneg %p55
        %s289 = sand.u32 %s23, 1
        %s290 = scalar_lea.sflag [#allocation6], %s289
        %s291 = sand.u32 %s73, 1
        %s292 = smul.addr %s291, 64
        %s293 = scalar_lea.vmem [#allocation5], %s292
        %p294 = pneg %p86
        %p295 = pneg %p83
        %p296 = pneg %p112
        %p297 = pneg %p109
        %p298 = pneg %p140
        %p299 = pneg %p137
        %s300 = sand.u32 %s127, 1
        %s301 = scalar_lea.sflag [#allocation4], %s300
        %s302 = sand.u32 %s127, 1
        %s303 = scalar_lea.vmem [#allocation8], %s302
        %s304 = smul.u32 2, %s27
        %s305 = smul.u32 2, %s27
        %s306 = smul.u32 2, %s27
        %v307 = vld [vmem:[%s261] sm:$0xff]
        %v308 = vld [vmem:[%s261 + $0x8] sm:$0xff]
        %v309 = vld [vmem:[%s261 + $0x10] sm:$0xff]
        %v310 = vld [vmem:[%s261 + $0x18] sm:$0xff]
        %v311 = vld [vmem:[%s261 + $0x20] sm:$0xff]
        %v312 = vld [vmem:[%s261 + $0x28] sm:$0xff]
        %v313 = vld [vmem:[%s261 + $0x30] sm:$0xff]
        %v314 = vld [vmem:[%s261 + $0x38] sm:$0xff]
        %v315 = vld [vmem:[%s271] sm:$0xff]
        %v316 = vld [vmem:[%s271 + $0x8] sm:$0xff]
        %v317 = vld [vmem:[%s271 + $0x10] sm:$0xff]
        %v318 = vld [vmem:[%s271 + $0x18] sm:$0xff]
        %v319 = vld [vmem:[%s271 + $0x20] sm:$0xff]
        %v320 = vld [vmem:[%s271 + $0x28] sm:$0xff]
        %v321 = vld [vmem:[%s271 + $0x30] sm:$0xff]
        %v322 = vld [vmem:[%s271 + $0x38] sm:$0xff]
        %v323 = vld [vmem:[#allocation7] sm:$0xff]
        %v324 = vld [vmem:[#allocation7 + $0x8] sm:$0xff]
        %v325 = vld [vmem:[#allocation7 + $0x10] sm:$0xff]
        %v326 = vld [vmem:[#allocation7 + $0x18] sm:$0xff]
        %v327 = vld [vmem:[#allocation7 + $0x20] sm:$0xff]
        %v328 = vld [vmem:[#allocation7 + $0x28] sm:$0xff]
        %v329 = vld [vmem:[#allocation7 + $0x30] sm:$0xff]
        %v330 = vld [vmem:[#allocation7 + $0x38] sm:$0xff]
        %v331 = vmul.f32 %v323, %v323
        %v332 = vmul.f32 %v324, %v324
        %v333 = vmul.f32 %v325, %v325
        %v334 = vmul.f32 %v326, %v326
        %v335 = vmul.f32 %v327, %v327
        %v336 = vmul.f32 %v328, %v328
        %v337 = vmul.f32 %v329, %v329
        %v338 = vmul.f32 %v330, %v330
        %v339 = vsub.f32 0.0, %v331
        %v340 = vsub.f32 0.0, %v332
        %v341 = vsub.f32 0.0, %v333
        %v342 = vsub.f32 0.0, %v334
        %v343 = vsub.f32 0.0, %v335
        %v344 = vsub.f32 0.0, %v336
        %v345 = vsub.f32 0.0, %v337
        %v346 = vsub.f32 0.0, %v338
        %v347 = vmul.f32 %v339, 100.0
        %v348 = vmul.f32 %v340, 100.0
        %v349 = vmul.f32 %v341, 100.0
        %v350 = vmul.f32 %v342, 100.0
        %v351 = vmul.f32 %v343, 100.0
        %v352 = vmul.f32 %v344, 100.0
        %v353 = vmul.f32 %v345, 100.0
        %v354 = vmul.f32 %v346, 100.0
        %v355 = vmul.f32 %v347, 1.442695
        %v356 = vpow.pop %v355
        %v357 = vmul.f32 %v348, 1.442695
        %v358 = vpow.pop %v357
        %v359 = vmul.f32 %v349, 1.442695
        %v360 = vpow.pop %v359
        %v361 = vmul.f32 %v350, 1.442695
        %v362 = vpow.pop %v361
        %v363 = vmul.f32 %v351, 1.442695
        %v364 = vpow.pop %v363
        %v365 = vmul.f32 %v352, 1.442695
        %v366 = vpow.pop %v365
        %v367 = vmul.f32 %v353, 1.442695
        %v368 = vpow.pop %v367
        %v369 = vmul.f32 %v354, 1.442695
        %v370 = vpow.pop %v369
        %v371 = vmul.f32 %v356, 0.9
        %v372 = vmul.f32 %v358, 0.9
        %v373 = vmul.f32 %v360, 0.9
        %v374 = vmul.f32 %v362, 0.9
        %v375 = vmul.f32 %v364, 0.9
        %v376 = vmul.f32 %v366, 0.9
        %v377 = vmul.f32 %v368, 0.9
        %v378 = vmul.f32 %v370, 0.9
        %v379 = vadd.f32 %v371, 0.1
        %v380 = vadd.f32 %v372, 0.1
        %v381 = vadd.f32 %v373, 0.1
        %v382 = vadd.f32 %v374, 0.1
        %v383 = vadd.f32 %v375, 0.1
        %v384 = vadd.f32 %v376, 0.1
        %v385 = vadd.f32 %v377, 0.1
        %v386 = vadd.f32 %v378, 0.1
        %v387 = vmul.f32 %v356, 0.5
        %v388 = vmul.f32 %v358, 0.5
        %v389 = vmul.f32 %v360, 0.5
        %v390 = vmul.f32 %v362, 0.5
        %v391 = vmul.f32 %v364, 0.5
        %v392 = vmul.f32 %v366, 0.5
        %v393 = vmul.f32 %v368, 0.5
        %v394 = vmul.f32 %v370, 0.5
        %v395 = vsub.f32 1.0, %v387
        %v396 = vsub.f32 1.0, %v388
        %v397 = vsub.f32 1.0, %v389
        %v398 = vsub.f32 1.0, %v390
        %v399 = vsub.f32 1.0, %v391
        %v400 = vsub.f32 1.0, %v392
        %v401 = vsub.f32 1.0, %v393
        %v402 = vsub.f32 1.0, %v394
        %v403 = vsub.f32 1.0, %v315
        %v404 = vsub.f32 1.0, %v316
        %v405 = vsub.f32 1.0, %v317
        %v406 = vsub.f32 1.0, %v318
        %v407 = vsub.f32 1.0, %v319
        %v408 = vsub.f32 1.0, %v320
        %v409 = vsub.f32 1.0, %v321
        %v410 = vsub.f32 1.0, %v322
        %v411 = vmul.f32 %v307, %v403
        %v412 = vmul.f32 %v308, %v404
        %v413 = vmul.f32 %v309, %v405
        %v414 = vmul.f32 %v310, %v406
        %v415 = vmul.f32 %v311, %v407
        %v416 = vmul.f32 %v312, %v408
        %v417 = vmul.f32 %v313, %v409
        %v418 = vmul.f32 %v314, %v410
        %v419 = vsub.f32 1.0, %v307
        %v420 = vsub.f32 1.0, %v308
        %v421 = vsub.f32 1.0, %v309
        %v422 = vsub.f32 1.0, %v310
        %v423 = vsub.f32 1.0, %v311
        %v424 = vsub.f32 1.0, %v312
        %v425 = vsub.f32 1.0, %v313
        %v426 = vsub.f32 1.0, %v314
        %v427 = vmul.f32 %v419, %v315
        %v428 = vmul.f32 %v420, %v316
        %v429 = vmul.f32 %v421, %v317
        %v430 = vmul.f32 %v422, %v318
        %v431 = vmul.f32 %v423, %v319
        %v432 = vmul.f32 %v424, %v320
        %v433 = vmul.f32 %v425, %v321
        %v434 = vmul.f32 %v426, %v322
        %v435 = vmul.f32 %v411, %v379
        %v436 = vmul.f32 %v412, %v380
        %v437 = vmul.f32 %v413, %v381
        %v438 = vmul.f32 %v414, %v382
        %v439 = vmul.f32 %v415, %v383
        %v440 = vmul.f32 %v416, %v384
        %v441 = vmul.f32 %v417, %v385
        %v442 = vmul.f32 %v418, %v386
        %v443 = vmul.f32 %v427, %v395
        %v444 = vmul.f32 %v428, %v396
        %v445 = vmul.f32 %v429, %v397
        %v446 = vmul.f32 %v430, %v398
        %v447 = vmul.f32 %v431, %v399
        %v448 = vmul.f32 %v432, %v400
        %v449 = vmul.f32 %v433, %v401
        %v450 = vmul.f32 %v434, %v402
        %v451 = vadd.f32 %v435, %v443
        %v452 = vadd.f32 %v436, %v444
        %v453 = vadd.f32 %v437, %v445
        %v454 = vadd.f32 %v438, %v446
        %v455 = vadd.f32 %v439, %v447
        %v456 = vadd.f32 %v440, %v448
        %v457 = vadd.f32 %v441, %v449
        %v458 = vadd.f32 %v442, %v450
        %v459 = vadd.f32 %v451, %v453
        %v460 = vadd.f32 %v459, %v455
        %v461 = vadd.f32 %v460, %v457
        %v462 = vadd.f32 %v452, %v454
        %v463 = vadd.f32 %v462, %v456
        %v464 = vadd.f32 %v463, %v458
        %v465 = vadd.f32 %v461, %v464
        %v466 = vrot.slane %v465, 4
        %v467 = vadd.f32 %v465, %v466
        %v468 = vrot.slane %v467, 2
        %v469 = vadd.f32 %v467, %v468
        %v470 = vrot.slane %v469, 1
        %v471 = vadd.f32 %v469, %v470
        %472 = vst [vmem:[%s303] sm:$0x1] %v471
        %s473 = sand.u32 %s127, 1
        %s474 = scalar_lea.sflag [#allocation4], %s473
        %s475 = sand.u32 %s127, 1
        %s476 = scalar_lea.vmem [#allocation8], %s475
        // Predicated region
        $region45: #{tpu_custom_call.1} parent=31 // pred_check
          %p477 = pneg %p137
        $region46: #{tpu_custom_call.1} parent=31 // pred_check_branch
          %479 = sbr.rel (%p477) target = $region48
        $region47: #{tpu_custom_call.1} parent=31 // pred_region
          %481 = vsyncadd %s474, 0
          %s482 = sadd.s32 %s27, %s28
          %s483 = scalar_lea.hbm %s3, %s482
          %s485 = sshll.u32 %s476, 4
          %s486 = int_to_ptr.vmem [resolvable:$true] %s485
          %s487 = sshll.u32 %s483, 4
          %s488 = int_to_ptr.hbm [resolvable:$true] %s487
          %490 = dma.vmem_to_hbm [thread:$0]  %s486, 16, %s488, %s474
        $region48: #{tpu_custom_call.1} parent=31 // pred_fallthru
          _
      $region32: #{tpu_custom_call.1} parent=5 // pred_fallthru
        _
      %p491 = scmp.le.s32.totalorder 2, %s18
      // Predicated region
      $region49: #{tpu_custom_call.1} parent=5 // pred_check
        %p492 = pneg %p491
      $region50: #{tpu_custom_call.1} parent=5 // pred_check_branch
        %494 = sbr.rel (%p492) target = $region52
      $region51: #{tpu_custom_call.1} parent=5 // pred_region
        %s495 = ssub.s32 %s18, 2
        // Predicated region
        $region53: #{tpu_custom_call.1} parent=51 // pred_check
          %p496 = pneg %p143
        $region54: #{tpu_custom_call.1} parent=51 // pred_check_branch
          %498 = sbr.rel (%p496) target = $region56
        $region55: #{tpu_custom_call.1} parent=51 // pred_region
          %s499 = sand.u32 %s128, 1
          %s500 = scalar_lea.sflag [#allocation4], %s499
          %s501 = sand.u32 %s128, 1
          %s502 = scalar_lea.vmem [#allocation8], %s501
          %504 = dma.done %s500, 16
        $region56: #{tpu_custom_call.1} parent=51 // pred_fallthru
          _
      $region52: #{tpu_custom_call.1} parent=5 // pred_fallthru
        _
    $region6: #{tpu_custom_call.1} parent=1 // loop_footer
      %s22 = sadd.s32 1, %s18
    $region7: #{tpu_custom_call.1} parent=1 // loop_footer_branch
      %17 = sbr.rel target = $region3
    $region8: #{tpu_custom_call.1} parent=1 // loop_exit
      _
    %505 = vsyncpa [#allocation3], 1
    %s506 = scalar_lea.sflag [#allocation3], 1
    %507 = vsyncpa %s506, 1
    %508 = vsyncpa [#allocation6], 1
    %s509 = scalar_lea.sflag [#allocation6], 1
    %510 = vsyncpa %s509, 1
    %511 = vsyncpa [#allocation4], 1
    %s512 = scalar_lea.sflag [#allocation4], 1
    %513 = vsyncpa %s512, 1

</llo_original>
